<compile_context>
chip_gen: v7x
topology: tpu7x:2x2x1
jax: 0.10.0
libtpu: 0.0.40
codegen_flags: <defaults>
</compile_context>

<pallas_src>
import functools

import jax
import jax.numpy as jnp
from jax.experimental import pallas as pl
from jax.experimental.pallas import tpu as pltpu

_IGNORE = 255
_ENT_SCALE = 1.0 / 2.9444


def _round_up(x, m):
    return ((x + m - 1) // m) * m


# --------------------------------------------------------------------------------------
# Kernel 1: softmax + entropy + lovasz errors, packed into a sortable uint32 key.
#   pred_ref : (C, TN) f32 logits for batch b, pixel tile i (padded pixel cols are 0)
#   lab_ref  : (1, TN) int32 labels (padded pixels carry 255)
# outputs:
#   key_ref  : (C, TN) uint32  = ~( bits(|fg - P_c|) & ~1 | fg )   (err=fg=0 on ignore/pad)
#   gts_ref  : (C, 1)  per-class foreground totals (accumulated over the whole grid)
#   ent_ref  : (1, 1)  SMEM: sum over real pixels of ((H/2.9444)^2 + 1e-8)^2
# --------------------------------------------------------------------------------------
def _softmax_entropy_kernel(pred_ref, lab_ref, key_ref, gts_ref, ent_ref,
                            gts_acc, ent_acc, *, hw):
    b = pl.program_id(0)
    i = pl.program_id(1)
    c, tn = pred_ref.shape

    @pl.when(jnp.logical_and(b == 0, i == 0))
    def _init():
        gts_acc[...] = jnp.zeros_like(gts_acc)
        ent_acc[...] = jnp.zeros_like(ent_acc)

    x = pred_ref[...]                                   # (C, TN) f32
    lab = lab_ref[...]                                  # (1, TN) int32

    # softmax / log-softmax over the class (sublane) axis (exact division: kernel is
    # HBM-bound, and it keeps err / entropy faithful to the torch reference).
    m = jnp.max(x, axis=0, keepdims=True)
    z = x - m
    ex = jnp.exp(z)
    s = jnp.sum(ex, axis=0, keepdims=True)
    probs = ex / s
    logp = z - jnp.log(s)

    # entropy term over ALL real pixels (incl. ignore=255), excluding per-batch padding.
    ent = -jnp.sum(probs * logp, axis=0, keepdims=True) * _ENT_SCALE   # (1, TN)
    ent2 = ent * ent + 1e-8
    ent4 = ent2 * ent2
    lane = jax.lax.broadcasted_iota(jnp.int32, (1, tn), 1)
    real = (i * tn + lane) < hw                         # in-batch pixel index < H*W
    ent_acc[...] += jnp.where(real, ent4, 0.0)          # lane-vector acc: no per-step reduce

    # lovasz inputs: fg_c = (label == c) & valid; err = |fg - P_c| (0 on ignore / padding)
    cls = jax.lax.broadcasted_iota(jnp.int32, (c, tn), 0)
    valid = lab != _IGNORE
    fg_bool = jnp.logical_and(lab == cls, valid)
    fg = fg_bool.astype(jnp.float32)
    err = jnp.abs(fg - probs) * valid.astype(jnp.float32)

    # pack fg into the LSB of the (non-negative) error bits; complement so that an
    # ASCENDING uint32 sort yields the DESCENDING error order.
    err_bits = pltpu.bitcast(err, jnp.uint32)
    packed = (err_bits & jnp.uint32(0xFFFFFFFE)) | fg_bool.astype(jnp.uint32)
    key_ref[...] = ~packed

    gts_acc[...] += jnp.sum(fg, axis=1, keepdims=True)

    @pl.when(jnp.logical_and(b == pl.num_programs(0) - 1,
                             i == pl.num_programs(1) - 1))
    def _finalize():
        gts_ref[...] = gts_acc[...]
        ent_ref[0, 0] = jnp.sum(ent_acc[...])


# --------------------------------------------------------------------------------------
# Kernel 2: blocked Lovasz-Softmax scan on pre-sorted, packed, class-major data.
#   key_ref : (C, TB) complemented packed keys (fat tile; TB = S * tk)
#   gts_ref : (C, 1)  per-class foreground totals
#   tri_ref : (tk, tk) bf16 upper-triangular ones (constant block, fetched once)
# carries (VMEM scratch across the sequential grid axis; loop-carried vregs inside):
#   carry_ref : running inclusive cumsum(fg) per class
#   jprev_ref : last jaccard column of the previous sub-tile
#   acc_ref   : per-class running dot(errors_sorted, lovasz_grad)
# --------------------------------------------------------------------------------------
def _lovasz_kernel(key_ref, gts_ref, tri_ref, loss_ref,
                   carry_ref, jprev_ref, acc_ref, *, tk):
    k = pl.program_id(0)
    c, tb = key_ref.shape
    n_sub = tb // tk

    @pl.when(k == 0)
    def _init():
        carry_ref[...] = jnp.zeros_like(carry_ref)
        jprev_ref[...] = jnp.zeros_like(jprev_ref)
        acc_ref[...] = jnp.zeros_like(acc_ref)

    gts = gts_ref[...]                                   # (C, 1)
    tri = tri_ref[...]                                   # (tk, tk) bf16
    local = jax.lax.broadcasted_iota(jnp.int32, (c, tk), 1)

    def body(s, carries):
        carry, jprev, acc = carries
        start = pl.multiple_of(s * tk, tk)
        bits = ~key_ref[:, pl.ds(start, tk)]             # undo the sort complement
        fg = (bits & jnp.uint32(1)).astype(jnp.float32)  # 0/1 foreground
        err = pltpu.bitcast(bits & jnp.uint32(0xFFFFFFFE), jnp.float32)

        # in-tile inclusive cumsum along the pixel (lane) axis: bf16 tri matmul (exact
        # for 0/1 data) plus the running carry from previous sub-tiles / grid steps.
        cs = jnp.dot(fg.astype(jnp.bfloat16), tri,
                     preferred_element_type=jnp.float32) + carry

        pos = (k * tb + s * tk + local + 1).astype(jnp.float32)   # global 1-based index
        intersection = gts - cs
        union = gts + (pos - cs)                          # cumsum(1-fg) = pos - cumsum(fg)
        jac = 1.0 - intersection / union                  # exact divide (review request)

        # lovasz grad: jaccard[1:] -= jaccard[:-1], carried across sub-tile boundaries
        prev = pltpu.roll(jac, shift=1, axis=1)
        prev = jnp.where(local == 0, jprev, prev)
        grad = jac - prev

        acc = acc + jnp.sum(err * grad, axis=1, keepdims=True)
        return cs[:, tk - 1:tk], jac[:, tk - 1:tk], acc   # carry = last cumsum column

    carry, jprev, acc = jax.lax.fori_loop(
        0, n_sub, body,
        (carry_ref[...], jprev_ref[...], acc_ref[...]),
        unroll=True)
    carry_ref[...] = carry
    jprev_ref[...] = jprev
    acc_ref[...] = acc

    @pl.when(k == pl.num_programs(0) - 1)
    def _finalize():
        present = (gts > 0.0).astype(jnp.float32)         # classes present among valid px
        n_present = jnp.sum(present)
        # TODO(synk): reference returns probas*0 (an empty tensor) when there is no valid
        # pixel at all; here that degenerate case collapses to a scalar 0.
        loss_ref[0, 0] = jnp.sum(acc * present) / jnp.maximum(n_present, 1.0)


# --------------------------------------------------------------------------------------
# Wrapper
# --------------------------------------------------------------------------------------
def gta_self_training_loss(pred, label):
    """pred: [B, C, H, W] float logits (NCHW), label: [B, H, W] int (255 = ignore)."""
    B, C, H, W = pred.shape
    HW = H * W
    N = B * HW

    TK = 256                                   # lovasz sub-tile (MXU cumsum matmul)
    TN = min(8192, _round_up(HW, TK))          # kernel-1 per-batch pixel tile (fat)
    HWp = _round_up(HW, TN)                    # per-batch padded pixel count
    n_tiles_pb = HWp // TN
    Np = B * HWp                               # total class-major columns

    TB = TK * 16                               # kernel-2 fat tile (<= 4096)
    while Np % TB:
        TB //= 2                               # Np is a multiple of 256, so this terminates

    # logits stay in native [B, C, HW] layout (no transpose); pad pixels only if needed.
    pred3 = pred.reshape(B, C, HW).astype(jnp.float32)
    if HWp != HW:
        pred3 = jnp.pad(pred3, ((0, 0), (0, 0), (0, HWp - HW)))
    lab = label.reshape(B, HW).astype(jnp.int32)
    if HWp != HW:
        lab = jnp.pad(lab, ((0, 0), (0, HWp - HW)), constant_values=_IGNORE)
    lab = lab.reshape(1, Np)

    keyc, gts, ent_sum = pl.pallas_call(
        functools.partial(_softmax_entropy_kernel, hw=HW),
        grid=(B, n_tiles_pb),
        out_shape=(
            jax.ShapeDtypeStruct((C, Np), jnp.uint32),
            jax.ShapeDtypeStruct((C, 1), jnp.float32),
            jax.ShapeDtypeStruct((1, 1), jnp.float32),
        ),
        in_specs=[
            pl.BlockSpec((None, C, TN), lambda b, i: (b, 0, i)),
            pl.BlockSpec((1, TN), lambda b, i: (0, b * n_tiles_pb + i)),
        ],
        out_specs=(
            pl.BlockSpec((C, TN), lambda b, i: (0, b * n_tiles_pb + i)),
            pl.BlockSpec((C, 1), lambda b, i: (0, 0)),
            pl.BlockSpec(memory_space=pltpu.MemorySpace.SMEM),
        ),
        scratch_shapes=[
            pltpu.VMEM((C, 1), jnp.float32),   # gts accumulator
            pltpu.VMEM((1, TN), jnp.float32),  # entropy lane-vector accumulator
        ],
        compiler_params=pltpu.CompilerParams(
            dimension_semantics=("arbitrary", "arbitrary"),  # resident accumulators
        ),
    )(pred3, lab)

    # single ascending sort of the complemented packed keys == per-class descending-error
    # sort of (err, fg) together; real C rows only, one uint32 array.
    keyc_sorted = jnp.sort(keyc, axis=1)

    # constant TK x TK upper-triangular ones (bf16) for the in-tile cumsum matmul.
    tri = (jax.lax.broadcasted_iota(jnp.int32, (TK, TK), 0)
           <= jax.lax.broadcasted_iota(jnp.int32, (TK, TK), 1)).astype(jnp.bfloat16)

    n_big = Np // TB
    loss_seg = pl.pallas_call(
        functools.partial(_lovasz_kernel, tk=TK),
        grid=(n_big,),
        out_shape=jax.ShapeDtypeStruct((1, 1), jnp.float32),
        in_specs=[
            pl.BlockSpec((C, TB), lambda k: (0, k)),
            pl.BlockSpec((C, 1), lambda k: (0, 0)),
            pl.BlockSpec((TK, TK), lambda k: (0, 0)),     # constant block -> fetched once
        ],
        out_specs=pl.BlockSpec(memory_space=pltpu.MemorySpace.SMEM),
        scratch_shapes=[
            pltpu.VMEM((C, 1), jnp.float32),   # cumsum(fg) carry
            pltpu.VMEM((C, 1), jnp.float32),   # previous sub-tile's last jaccard column
            pltpu.VMEM((C, 1), jnp.float32),   # per-class loss accumulator
        ],
        compiler_params=pltpu.CompilerParams(
            dimension_semantics=("arbitrary",),            # sequential scan with carries
        ),
    )(keyc_sorted, gts, tri)

    loss_ent = ent_sum[0, 0] / float(N)                    # mean over all B*H*W pixels
    return loss_seg[0, 0] + 0.005 * loss_ent


class GtASelfTrainingLoss:
    """JAX/Pallas port of mmseg_custom GtASelfTrainingLoss (no learnable parameters)."""

    def __init__(self, loss_weight=1.0, loss_name="loss_GtA_selftraining_losss"):
        self.loss_weight = loss_weight
        self._loss_name = loss_name

    def __call__(self, cls_score, label, **kwargs):
        return self.loss_weight * gta_self_training_loss(cls_score, label)

    @property
    def loss_name(self):
        return self._loss_name


if __name__ == "__main__":
    key = jax.random.PRNGKey(0)
    k1, k2, k3 = jax.random.split(key, 3)

    B, C, H, W = 2, 4, 16, 16
    pred = jax.random.normal(k1, (B, C, H, W), dtype=jnp.float32)
    label = jax.random.randint(k2, (B, H, W), 0, C, dtype=jnp.int32)
    # sprinkle some ignore (255) labels to exercise the ignore path
    ignore_mask = jax.random.uniform(k3, (B, H, W)) < 0.1
    label = jnp.where(ignore_mask, _IGNORE, label).astype(jnp.int32)

    loss_fn = GtASelfTrainingLoss(loss_weight=1.0)
    loss = loss_fn(pred, label)
    jax.block_until_ready(loss)
    assert jnp.isfinite(loss)
    print("KERNEL_OK")
</pallas_src>

<mosaic_0001>
module attributes {stable_mosaic.version = 11 : i64} {
  func.func @_softmax_entropy_kernel(%arg0: i32, %arg1: i32, %arg2: memref<1x4x256xf32, #tpu.memory_space<vmem>>, %arg3: memref<1x256xi32, #tpu.memory_space<vmem>>, %arg4: memref<4x256xi32, #tpu.memory_space<vmem>>, %arg5: memref<4x1xf32, #tpu.memory_space<vmem>>, %arg6: memref<1x1xf32, #tpu.memory_space<smem>>, %arg7: memref<4x1xf32, #tpu.memory_space<vmem>>, %arg8: memref<1x256xf32, #tpu.memory_space<vmem>>) attributes {dimension_semantics = [#tpu.dimension_semantics<arbitrary>, #tpu.dimension_semantics<arbitrary>], iteration_bounds = array<i64: 2, 1>, scalar_prefetch = 0 : i64, scratch_operands = 2 : i64, tpu.core_type = #tpu.core_type<tc>, window_params = [{transform_indices = @transform_0, window_bounds = array<i64: 1, 4, 256>}, {transform_indices = @transform_1, window_bounds = array<i64: 1, 256>}, {transform_indices = @transform_2, window_bounds = array<i64: 4, 256>}, {pipeline_mode = #tpu.pipeline_mode<synchronous>, transform_indices = @transform_3, window_bounds = array<i64: 4, 1>}, {transform_indices = @transform_4, window_bounds = array<i64: 1, 1>}]} {
    %c0_i32 = arith.constant 0 : i32
    %0 = arith.cmpi eq, %arg0, %c0_i32 : i32
    %c0_i32_0 = arith.constant 0 : i32
    %1 = arith.cmpi eq, %arg1, %c0_i32_0 : i32
    %2 = arith.andi %0, %1 : i1
    %3 = arith.extui %2 : i1 to i32
    %c0_i32_1 = arith.constant 0 : i32
    %4 = arith.cmpi ne, %3, %c0_i32_1 : i32
    scf.if %4 {
      %cst_27 = arith.constant 0.000000e+00 : f32
      %74 = vector.broadcast %cst_27 : f32 to vector<4x1xf32>
      %c0_28 = arith.constant 0 : index
      %c0_29 = arith.constant 0 : index
      %75 = vector.load %arg7[%c0_28, %c0_29] : memref<4x1xf32, #tpu.memory_space<vmem>>, vector<4x1xf32>
      tpu.vector_store %arg7[%c0_28, %c0_29], %74 {strides = array<i32>} : memref<4x1xf32, #tpu.memory_space<vmem>>, vector<4x1xf32>,
      %cst_30 = arith.constant 0.000000e+00 : f32
      %76 = vector.broadcast %cst_30 : f32 to vector<1x256xf32>
      %c0_31 = arith.constant 0 : index
      %c0_32 = arith.constant 0 : index
      %77 = vector.load %arg8[%c0_31, %c0_32] : memref<1x256xf32, #tpu.memory_space<vmem>>, vector<1x256xf32>
      tpu.vector_store %arg8[%c0_31, %c0_32], %76 {strides = array<i32>} : memref<1x256xf32, #tpu.memory_space<vmem>>, vector<1x256xf32>,
    } else {
    }
    %c0 = arith.constant 0 : index
    %c0_2 = arith.constant 0 : index
    %c0_3 = arith.constant 0 : index
    %5 = vector.load %arg2[%c0, %c0_2, %c0_3] : memref<1x4x256xf32, #tpu.memory_space<vmem>>, vector<1x4x256xf32>
    %6 = vector.shape_cast %5 : vector<1x4x256xf32> to vector<4x256xf32>
    %c0_4 = arith.constant 0 : index
    %c0_5 = arith.constant 0 : index
    %7 = vector.load %arg3[%c0_4, %c0_5] : memref<1x256xi32, #tpu.memory_space<vmem>>, vector<1x256xi32>
    %cst = arith.constant dense<0xFF800000> : vector<256xf32>
    %8 = vector.multi_reduction <maximumf>, %6, %cst [0] : vector<4x256xf32> to vector<256xf32>
    %9 = vector.shape_cast %8 : vector<256xf32> to vector<1x256xf32>
    %10 = vector.broadcast %9 : vector<1x256xf32> to vector<4x256xf32>
    %11 = arith.subf %6, %10 : vector<4x256xf32>
    %12 = math.exp %11 : vector<4x256xf32>
    %cst_6 = arith.constant dense<0.000000e+00> : vector<256xf32>
    %13 = vector.multi_reduction <add>, %12, %cst_6 [0] : vector<4x256xf32> to vector<256xf32>
    %14 = vector.shape_cast %13 : vector<256xf32> to vector<1x256xf32>
    %15 = vector.broadcast %14 : vector<1x256xf32> to vector<4x256xf32>
    %16 = arith.divf %12, %15 : vector<4x256xf32>
    %17 = math.log %14 : vector<1x256xf32>
    %18 = vector.broadcast %17 : vector<1x256xf32> to vector<4x256xf32>
    %19 = arith.subf %11, %18 : vector<4x256xf32>
    %20 = arith.mulf %16, %19 : vector<4x256xf32>
    %cst_7 = arith.constant dense<0.000000e+00> : vector<256xf32>
    %21 = vector.multi_reduction <add>, %20, %cst_7 [0] : vector<4x256xf32> to vector<256xf32>
    %22 = vector.shape_cast %21 : vector<256xf32> to vector<1x256xf32>
    %cst_8 = arith.constant 0.000000e+00 : f32
    %23 = vector.broadcast %cst_8 : f32 to vector<1x256xf32>
    %24 = arith.subf %23, %22 : vector<1x256xf32>
    %cst_9 = arith.constant 0.339627773 : f32
    %25 = vector.broadcast %cst_9 : f32 to vector<1x256xf32>
    %26 = arith.mulf %24, %25 : vector<1x256xf32>
    %27 = arith.mulf %26, %26 : vector<1x256xf32>
    %cst_10 = arith.constant 9.99999993E-9 : f32
    %28 = vector.broadcast %cst_10 : f32 to vector<1x256xf32>
    %29 = arith.addf %27, %28 : vector<1x256xf32>
    %30 = arith.mulf %29, %29 : vector<1x256xf32>
    %31 = tpu.iota {dimensions = array<i32: 1>} : vector<1x256xi32>
    %c256_i32 = arith.constant 256 : i32
    %32 = arith.muli %arg1, %c256_i32 : i32
    %33 = vector.broadcast %32 : i32 to vector<1x256xi32>
    %34 = arith.addi %33, %31 : vector<1x256xi32>
    %c256_i32_11 = arith.constant 256 : i32
    %35 = vector.broadcast %c256_i32_11 : i32 to vector<1x256xi32>
    %36 = arith.cmpi slt, %34, %35 : vector<1x256xi32>
    %c0_12 = arith.constant 0 : index
    %c0_13 = arith.constant 0 : index
    %37 = vector.load %arg8[%c0_12, %c0_13] : memref<1x256xf32, #tpu.memory_space<vmem>>, vector<1x256xf32>
    %cst_14 = arith.constant 0.000000e+00 : f32
    %38 = vector.broadcast %cst_14 : f32 to vector<1x256xf32>
    %39 = arith.select %36, %30, %38 : vector<1x256xi1>, vector<1x256xf32>
    %40 = arith.addf %37, %39 : vector<1x256xf32>
    %c0_15 = arith.constant 0 : index
    %c0_16 = arith.constant 0 : index
    %41 = vector.load %arg8[%c0_15, %c0_16] : memref<1x256xf32, #tpu.memory_space<vmem>>, vector<1x256xf32>
    tpu.vector_store %arg8[%c0_15, %c0_16], %40 {strides = array<i32>} : memref<1x256xf32, #tpu.memory_space<vmem>>, vector<1x256xf32>,
    %42 = tpu.iota {dimensions = array<i32: 0>} : vector<4x256xi32>
    %c255_i32 = arith.constant 255 : i32
    %43 = vector.broadcast %c255_i32 : i32 to vector<1x256xi32>
    %44 = arith.cmpi ne, %7, %43 : vector<1x256xi32>
    %45 = vector.broadcast %7 : vector<1x256xi32> to vector<4x256xi32>
    %46 = arith.cmpi eq, %45, %42 : vector<4x256xi32>
    %47 = vector.broadcast %44 : vector<1x256xi1> to vector<4x256xi1>
    %48 = arith.andi %46, %47 : vector<4x256xi1>
    %49 = arith.extui %48 : vector<4x256xi1> to vector<4x256xi32>
    %50 = arith.sitofp %49 : vector<4x256xi32> to vector<4x256xf32>
    %51 = arith.subf %50, %16 : vector<4x256xf32>
    %52 = math.absf %51 : vector<4x256xf32>
    %53 = arith.extui %44 : vector<1x256xi1> to vector<1x256xi32>
    %54 = arith.sitofp %53 : vector<1x256xi32> to vector<1x256xf32>
    %55 = vector.broadcast %54 : vector<1x256xf32> to vector<4x256xf32>
    %56 = arith.mulf %52, %55 : vector<4x256xf32>
    %57 = tpu.bitcast %56 : vector<4x256xf32> -> vector<4x256xi32>
    %c-2_i32 = arith.constant -2 : i32
    %58 = vector.broadcast %c-2_i32 : i32 to vector<4x256xi32>
    %59 = arith.andi %57, %58 : vector<4x256xi32>
    %60 = arith.extui %48 : vector<4x256xi1> to vector<4x256xi32>
    %61 = arith.ori %59, %60 : vector<4x256xi32>
    %cst_17 = arith.constant dense<-1> : vector<4x256xi32>
    %62 = arith.xori %61, %cst_17 : vector<4x256xi32>
    %c0_18 = arith.constant 0 : index
    %c0_19 = arith.constant 0 : index
    %63 = vector.load %arg4[%c0_18, %c0_19] : memref<4x256xi32, #tpu.memory_space<vmem>>, vector<4x256xi32>
    tpu.vector_store %arg4[%c0_18, %c0_19], %62 {strides = array<i32>} : memref<4x256xi32, #tpu.memory_space<vmem>>, vector<4x256xi32>,
    %c0_20 = arith.constant 0 : index
    %c0_21 = arith.constant 0 : index
    %64 = vector.load %arg7[%c0_20, %c0_21] : memref<4x1xf32, #tpu.memory_space<vmem>>, vector<4x1xf32>
    %cst_22 = arith.constant dense<0.000000e+00> : vector<4xf32>
    %65 = vector.multi_reduction <add>, %50, %cst_22 [1] : vector<4x256xf32> to vector<4xf32>
    %66 = vector.shape_cast %65 : vector<4xf32> to vector<4x1xf32>
    %67 = arith.addf %64, %66 : vector<4x1xf32>
    %c0_23 = arith.constant 0 : index
    %c0_24 = arith.constant 0 : index
    %68 = vector.load %arg7[%c0_23, %c0_24] : memref<4x1xf32, #tpu.memory_space<vmem>>, vector<4x1xf32>
    tpu.vector_store %arg7[%c0_23, %c0_24], %67 {strides = array<i32>} : memref<4x1xf32, #tpu.memory_space<vmem>>, vector<4x1xf32>,
    %c1_i32 = arith.constant 1 : i32
    %69 = arith.cmpi eq, %arg0, %c1_i32 : i32
    %c0_i32_25 = arith.constant 0 : i32
    %70 = arith.cmpi eq, %arg1, %c0_i32_25 : i32
    %71 = arith.andi %69, %70 : i1
    %72 = arith.extui %71 : i1 to i32
    %c0_i32_26 = arith.constant 0 : i32
    %73 = arith.cmpi ne, %72, %c0_i32_26 : i32
    scf.if %73 {
      %c0_27 = arith.constant 0 : index
      %c0_28 = arith.constant 0 : index
      %74 = vector.load %arg7[%c0_27, %c0_28] : memref<4x1xf32, #tpu.memory_space<vmem>>, vector<4x1xf32>
      %c0_29 = arith.constant 0 : index
      %c0_30 = arith.constant 0 : index
      %75 = vector.load %arg5[%c0_29, %c0_30] : memref<4x1xf32, #tpu.memory_space<vmem>>, vector<4x1xf32>
      tpu.vector_store %arg5[%c0_29, %c0_30], %74 {strides = array<i32>} : memref<4x1xf32, #tpu.memory_space<vmem>>, vector<4x1xf32>,
      %c0_31 = arith.constant 0 : index
      %c0_32 = arith.constant 0 : index
      %76 = vector.load %arg8[%c0_31, %c0_32] : memref<1x256xf32, #tpu.memory_space<vmem>>, vector<1x256xf32>
      %77 = vector.shape_cast %76 : vector<1x256xf32> to vector<1x1x256xf32>
      %cst_33 = arith.constant dense<0.000000e+00> : vector<1xf32>
      %78 = vector.multi_reduction <add>, %77, %cst_33 [1, 2] : vector<1x1x256xf32> to vector<1xf32>
      %79 = vector.shape_cast %78 : vector<1xf32> to vector<1x1x1xf32>
      %80 = vector.extract %79[0, 0, 0] : f32 from vector<1x1x1xf32>
      %c0_34 = arith.constant 0 : index
      %c0_35 = arith.constant 0 : index
      %81 = memref.load %arg6[%c0_34, %c0_35] : memref<1x1xf32, #tpu.memory_space<smem>>
      memref.store %80, %arg6[%c0_34, %c0_35] : memref<1x1xf32, #tpu.memory_space<smem>>
    } else {
    }
    return
  }
  func.func @transform_0(%arg0: i32, %arg1: i32) -> (i32, i32, i32) {
    %c0_i32 = arith.constant 0 : i32
    %c0_i32_0 = arith.constant 0 : i32
    return %arg0, %c0_i32, %arg1 : i32, i32, i32
  }
  func.func @transform_1(%arg0: i32, %arg1: i32) -> (i32, i32) {
    %c1_i32 = arith.constant 1 : i32
    %0 = arith.muli %arg0, %c1_i32 : i32
    %1 = arith.addi %0, %arg1 : i32
    %c0_i32 = arith.constant 0 : i32
    %c0_i32_0 = arith.constant 0 : i32
    return %c0_i32, %1 : i32, i32
  }
  func.func @transform_2(%arg0: i32, %arg1: i32) -> (i32, i32) {
    %c1_i32 = arith.constant 1 : i32
    %0 = arith.muli %arg0, %c1_i32 : i32
    %1 = arith.addi %0, %arg1 : i32
    %c0_i32 = arith.constant 0 : i32
    %c0_i32_0 = arith.constant 0 : i32
    return %c0_i32, %1 : i32, i32
  }
  func.func @transform_3(%arg0: i32, %arg1: i32) -> (i32, i32) {
    %c0_i32 = arith.constant 0 : i32
    %c0_i32_0 = arith.constant 0 : i32
    %c0_i32_1 = arith.constant 0 : i32
    return %c0_i32, %c0_i32_0 : i32, i32
  }
  func.func @transform_4(%arg0: i32, %arg1: i32) -> (i32, i32) {
    %c0_i32 = arith.constant 0 : i32
    %c0_i32_0 = arith.constant 0 : i32
    %c0_i32_1 = arith.constant 0 : i32
    return %c0_i32, %c0_i32_0 : i32, i32
  }
}

</mosaic_0001>

<llo_original>
// kernel: tpu_custom_call.1
$region0: #{tpu_custom_call.1}
  #allocation0 [shape = 'u32[]', space=smem, size = 0x4, offset = 0x4, fixed_abs, tag = 'smem constant byte address 0x4 - core index']
  #allocation1 [shape = 'u32[144,128]{1,0:T(1,128)}', space=vmem, size = 0x12000, scoped, tag = 'internal scratch']
  #allocation2 [shape = 'f32[4,1]{1,0:T(4,128)}', space=vmem, size = 0x800, scoped, tag = 'scratch operand']
  #allocation3 [shape = 'f32[1,256]{1,0:T(1,128)}', space=vmem, size = 0x400, scoped, tag = 'scratch operand']
  %s0 = inlined_call_operand.hbm [shape: f32[2,4,256], index: 0, kind: input, shape index: {}]
  %s1 = inlined_call_operand.hbm [shape: s32[1,512], index: 1, kind: input, shape index: {}]
  %s2 = inlined_call_operand.hbm [shape: u32[4,512], index: 2, kind: output, shape index: {0}]
  %s3 = inlined_call_operand.vmem [shape: f32[4,1], index: 3, kind: output, shape index: {1}]
  %s4 = inlined_call_operand.hbm [shape: f32[1,1], index: 4, kind: output, shape index: {2}]
  %5 = xla_tuple %s2, %s3, %s4
  %s6 = sld [smem:[#allocation0]]
  $region73: #{tpu_custom_call.1} parent=0
    _
  %s8 = ssub.s32 1, %s6
  %s9 = scalar_select 0, %s8, %s6
  $region1: #{tpu_custom_call.1} parent=0
    #allocation4 [shape = 'u8[8192]{0}', space=vmem, size = 0x2000, scoped, tag = 'input window, operand 0']
    #allocation5 [shape = 's32[2]{0}', space=sflag, size = 0x8, scoped, tag = 'scoped memory for tpu_custom_call.1']
    #allocation6 [shape = 's32[2]{0}', space=sflag, size = 0x8, scoped, tag = 'scoped memory for tpu_custom_call.1']
    #allocation7 [shape = 's32[2]{0}', space=sflag, size = 0x8, scoped, tag = 'scoped memory for tpu_custom_call.1']
    #allocation8 [shape = 'u8[2048]{0}', space=vmem, size = 0x800, scoped, tag = 'input window, operand 1']
    #allocation9 [shape = 's32[2]{0}', space=sflag, size = 0x8, scoped, tag = 'scoped memory for tpu_custom_call.1']
    #allocation10 [shape = 'u8[8192]{0}', space=vmem, size = 0x2000, scoped, tag = 'output window, operand 0']
    #allocation11 [shape = 'u8[512]{0}', space=smem, size = 0x200, scoped, tag = 'output window, operand 2, single buffered']
    %10 = vsyncpa [#allocation5], 0
    %s11 = scalar_lea.sflag [#allocation5], 1
    %12 = vsyncpa %s11, 0
    %13 = vsyncpa [#allocation9], 0
    %s14 = scalar_lea.sflag [#allocation9], 1
    %15 = vsyncpa %s14, 0
    %16 = vsyncpa [#allocation6], 0
    %s17 = scalar_lea.sflag [#allocation6], 1
    %18 = vsyncpa %s17, 0
    %19 = vsyncpa [#allocation7], 0
    loop: start=0, step=1, limit=4
    $region2: #{tpu_custom_call.1} parent=1 // loop_pre_header
      _
    $region3: #{tpu_custom_call.1} parent=1 // loop_header
      %s21 = sphi 0, %s25
      %p22 = scmp.ge.s32.totalorder %s21, 4
      %s28 = sphi 0, %s40
      %s29 = sphi 0, %s36
      %s30 = sphi 0, %s28
      %s31 = sphi 0, %s29
      %s32 = sphi 0, %s30
      %s33 = sphi 0, %s31
      %s45 = sphi 0, %s47
      %s48 = sphi 0, %s45
      %s49 = sphi 0, %s48
      %s65 = sphi 0, %s49
      %s73 = sphi 0, %s75
      %s76 = sphi 0, %s73
      %s77 = sphi 0, %s76
      %s93 = sphi 0, %s77
      %s101 = sphi 0, %s103
      %s104 = sphi 0, %s101
      %s105 = sphi 0, %s104
      %s121 = sphi 0, %s105
      %s125 = sphi 0, %s125
      %s127 = sphi 0, %s125
      %s128 = sphi 0, %s127
      %s142 = sphi 0, %s128
      %s146 = sphi 0, %s146
      %s148 = sphi 0, %s146
      %s149 = sphi 0, %s148
      %s163 = sphi 0, %s149
    $region4: #{tpu_custom_call.1} parent=1 // loop_header_branch
      %24 = sbr.rel (%p22) target = $region8
    $region5: #{tpu_custom_call.1} parent=1 // loop_body
      %s26 = ssub.s32 %s21, 1
      %s27 = ssub.s32 %s21, 2
      %s34 = sadd.s32 1, %s29
      %p35 = scmp.ge.s32.totalorder %s34, 1
      %s36 = scalar_select %p35, 0, %s34
      %s37 = sadd.s32 1, %s28
      %s38 = scalar_select %p35, %s37, %s28
      %p39 = scmp.ge.s32.totalorder %s38, 2
      %s40 = scalar_select %p39, 0, %s38
      %s41 = ssub.s32 %s28, %s40
      %s42 = ssub.s32 %s29, %s36
      %s43 = sor.u32 %s41, %s42
      %p44 = scmp.eq.s32.totalorder %s43, 0
      %s46 = sadd.s32 %s45, 1
      %s47 = scalar_select %p44, %s45, %s46
      %p50 = pneg %p44
      %p51 = scmp.eq.s32.totalorder %s21, 1
      %p52 = por %p50, %p51
      %p53 = scmp.ne.s32.totalorder %s45, %s48
      %p54 = scmp.eq.s32.totalorder %s21, 0
      %p55 = por %p53, %p54
      %p56 = scmp.ne.s32.totalorder %s45, %s48
      %p57 = scmp.eq.s32.totalorder %s26, 1
      %p58 = por %p56, %p57
      %p59 = scmp.ne.s32.totalorder %s48, %s49
      %p60 = scmp.eq.s32.totalorder %s26, 0
      %p61 = por %p59, %p60
      %p62 = scmp.ne.s32.totalorder %s48, %s49
      %p63 = scmp.eq.s32.totalorder %s27, 1
      %p64 = por %p62, %p63
      %p66 = scmp.ne.s32.totalorder %s49, %s65
      %p67 = scmp.eq.s32.totalorder %s27, 0
      %p68 = por %p66, %p67
      %s69 = sadd.s32 %s28, %s29
      %s70 = sadd.s32 %s40, %s36
      %s71 = ssub.s32 %s69, %s70
      %p72 = scmp.eq.s32.totalorder %s71, 0
      %s74 = sadd.s32 %s73, 1
      %s75 = scalar_select %p72, %s73, %s74
      %p78 = pneg %p72
      %p79 = scmp.eq.s32.totalorder %s21, 1
      %p80 = por %p78, %p79
      %p81 = scmp.ne.s32.totalorder %s73, %s76
      %p82 = scmp.eq.s32.totalorder %s21, 0
      %p83 = por %p81, %p82
      %p84 = scmp.ne.s32.totalorder %s73, %s76
      %p85 = scmp.eq.s32.totalorder %s26, 1
      %p86 = por %p84, %p85
      %p87 = scmp.ne.s32.totalorder %s76, %s77
      %p88 = scmp.eq.s32.totalorder %s26, 0
      %p89 = por %p87, %p88
      %p90 = scmp.ne.s32.totalorder %s76, %s77
      %p91 = scmp.eq.s32.totalorder %s27, 1
      %p92 = por %p90, %p91
      %p94 = scmp.ne.s32.totalorder %s77, %s93
      %p95 = scmp.eq.s32.totalorder %s27, 0
      %p96 = por %p94, %p95
      %s97 = sadd.s32 %s28, %s29
      %s98 = sadd.s32 %s40, %s36
      %s99 = ssub.s32 %s97, %s98
      %p100 = scmp.eq.s32.totalorder %s99, 0
      %s102 = sadd.s32 %s101, 1
      %s103 = scalar_select %p100, %s101, %s102
      %p106 = pneg %p100
      %p107 = scmp.eq.s32.totalorder %s21, 1
      %p108 = por %p106, %p107
      %p109 = scmp.ne.s32.totalorder %s101, %s104
      %p110 = scmp.eq.s32.totalorder %s21, 0
      %p111 = por %p109, %p110
      %p112 = scmp.ne.s32.totalorder %s101, %s104
      %p113 = scmp.eq.s32.totalorder %s26, 1
      %p114 = por %p112, %p113
      %p115 = scmp.ne.s32.totalorder %s104, %s105
      %p116 = scmp.eq.s32.totalorder %s26, 0
      %p117 = por %p115, %p116
      %p118 = scmp.ne.s32.totalorder %s104, %s105
      %p119 = scmp.eq.s32.totalorder %s27, 1
      %p120 = por %p118, %p119
      %p122 = scmp.ne.s32.totalorder %s105, %s121
      %p123 = scmp.eq.s32.totalorder %s27, 0
      %p124 = por %p122, %p123
      %s126 = sadd.s32 %s125, 1
      %p129 = scmp.eq.s32.totalorder %s21, 1
      %p130 = scmp.ne.s32.totalorder %s125, %s127
      %p131 = scmp.eq.s32.totalorder %s21, 0
      %p132 = por %p130, %p131
      %p133 = scmp.ne.s32.totalorder %s125, %s127
      %p134 = scmp.eq.s32.totalorder %s26, 1
      %p135 = por %p133, %p134
      %p136 = scmp.ne.s32.totalorder %s127, %s128
      %p137 = scmp.eq.s32.totalorder %s26, 0
      %p138 = por %p136, %p137
      %p139 = scmp.ne.s32.totalorder %s127, %s128
      %p140 = scmp.eq.s32.totalorder %s27, 1
      %p141 = por %p139, %p140
      %p143 = scmp.ne.s32.totalorder %s128, %s142
      %p144 = scmp.eq.s32.totalorder %s27, 0
      %p145 = por %p143, %p144
      %s147 = sadd.s32 %s146, 1
      %p150 = scmp.eq.s32.totalorder %s21, 1
      %p151 = scmp.ne.s32.totalorder %s146, %s148
      %p152 = scmp.eq.s32.totalorder %s21, 0
      %p153 = por %p151, %p152
      %p154 = scmp.ne.s32.totalorder %s146, %s148
      %p155 = scmp.eq.s32.totalorder %s26, 1
      %p156 = por %p154, %p155
      %p157 = scmp.ne.s32.totalorder %s148, %s149
      %p158 = scmp.eq.s32.totalorder %s26, 0
      %p159 = por %p157, %p158
      %p160 = scmp.ne.s32.totalorder %s148, %s149
      %p161 = scmp.eq.s32.totalorder %s27, 1
      %p162 = por %p160, %p161
      %p164 = scmp.ne.s32.totalorder %s149, %s163
      %p165 = scmp.eq.s32.totalorder %s27, 0
      %p166 = por %p164, %p165
      %p167 = scmp.le.s32.totalorder 1, %s21
      %p168 = scmp.lt.s32.totalorder %s21, 3
      %p169 = pnand %p167, %p168
      %p170 = pneg %p169
      // Predicated region
      $region9: #{tpu_custom_call.1} parent=5 // pred_check
        _
      $region10: #{tpu_custom_call.1} parent=5 // pred_check_branch
        %172 = sbr.rel (%p169) target = $region12
      $region11: #{tpu_custom_call.1} parent=5 // pred_region
        %s173 = ssub.s32 %s21, 1
      $region12: #{tpu_custom_call.1} parent=5 // pred_fallthru
        _
      %p174 = scmp.lt.s32.totalorder %s21, 2
      // Predicated region
      $region13: #{tpu_custom_call.1} parent=5 // pred_check
        %p175 = pneg %p174
      $region14: #{tpu_custom_call.1} parent=5 // pred_check_branch
        %177 = sbr.rel (%p175) target = $region16
      $region15: #{tpu_custom_call.1} parent=5 // pred_region
        // Predicated region
        $region17: #{tpu_custom_call.1} parent=15 // pred_check
          %p178 = pneg %p55
        $region18: #{tpu_custom_call.1} parent=15 // pred_check_branch
          %180 = sbr.rel (%p178) target = $region20
        $region19: #{tpu_custom_call.1} parent=15 // pred_region
          %s181 = sand.u32 %s45, 1
          %s182 = scalar_lea.sflag [#allocation5], %s181
          %s183 = sand.u32 %s45, 1
          %s184 = smul.addr %s183, 8
          %s185 = scalar_lea.vmem [#allocation4], %s184
          %s186 = smul.u32 2, %s29
          %s188 = ssub.s32 128, 128
          %189 = vsyncadd %s182, %s188
          %s190 = smul.addr %s28, 2
          %s191 = sadd.s32 %s186, %s190
          %s192 = smul.addr %s191, 64
          %s193 = scalar_lea.hbm %s0, %s192
          %s195 = sshll.u32 %s185, 4
          %s196 = int_to_ptr.vmem [resolvable:$true] %s195
          %198 = dma.hbm_to_vmem [thread:$0]  %s193, 128, %s196, %s182
        $region20: #{tpu_custom_call.1} parent=15 // pred_fallthru
          _
        // Predicated region
        $region21: #{tpu_custom_call.1} parent=15 // pred_check
          %p199 = pneg %p83
        $region22: #{tpu_custom_call.1} parent=15 // pred_check_branch
          %201 = sbr.rel (%p199) target = $region24
        $region23: #{tpu_custom_call.1} parent=15 // pred_region
          %s202 = sand.u32 %s73, 1
          %s203 = scalar_lea.sflag [#allocation9], %s202
          %s204 = sand.u32 %s73, 1
          %s205 = smul.addr %s204, 2
          %s206 = scalar_lea.vmem [#allocation8], %s205
          %s207 = sadd.s32 %s28, %s29
          %s208 = smul.u32 2, %s207
          %s210 = ssub.s32 32, 32
          %211 = vsyncadd %s203, %s210
          %s212 = smul.addr %s208, 16
          %s213 = scalar_lea.hbm %s1, %s212
          %s215 = sshll.u32 %s206, 4
          %s216 = int_to_ptr.vmem [resolvable:$true] %s215
          %218 = dma.hbm_to_vmem [thread:$0]  %s213, 32, %s216, %s203
        $region24: #{tpu_custom_call.1} parent=15 // pred_fallthru
          _
      $region16: #{tpu_custom_call.1} parent=5 // pred_fallthru
        _
      %p219 = scmp.le.s32.totalorder 1, %s21
      %p220 = scmp.lt.s32.totalorder %s21, 3
      %p221 = pnand %p219, %p220
      %p222 = pneg %p221
      // Predicated region
      $region25: #{tpu_custom_call.1} parent=5 // pred_check
        _
      $region26: #{tpu_custom_call.1} parent=5 // pred_check_branch
        %224 = sbr.rel (%p221) target = $region28
      $region27: #{tpu_custom_call.1} parent=5 // pred_region
        %s225 = ssub.s32 %s21, 1
        %s226 = sand.u32 %s48, 1
        %s227 = scalar_lea.sflag [#allocation5], %s226
        %s228 = sand.u32 %s48, 1
        %s229 = smul.addr %s228, 8
        %s230 = scalar_lea.vmem [#allocation4], %s229
        // Predicated region
        $region29: #{tpu_custom_call.1} parent=27 // pred_check
          %p231 = pneg %p61
        $region30: #{tpu_custom_call.1} parent=27 // pred_check_branch
          %233 = sbr.rel (%p231) target = $region32
        $region31: #{tpu_custom_call.1} parent=27 // pred_region
          %234 = dma.done %s227, 128
        $region32: #{tpu_custom_call.1} parent=27 // pred_fallthru
          _
        %s235 = sand.u32 %s76, 1
        %s236 = scalar_lea.sflag [#allocation9], %s235
        %s237 = sand.u32 %s76, 1
        %s238 = smul.addr %s237, 2
        %s239 = scalar_lea.vmem [#allocation8], %s238
        // Predicated region
        $region33: #{tpu_custom_call.1} parent=27 // pred_check
          %p240 = pneg %p89
        $region34: #{tpu_custom_call.1} parent=27 // pred_check_branch
          %242 = sbr.rel (%p240) target = $region36
        $region35: #{tpu_custom_call.1} parent=27 // pred_region
          %243 = dma.done %s236, 32
        $region36: #{tpu_custom_call.1} parent=27 // pred_fallthru
          _
        %s244 = sand.u32 %s48, 1
        %s245 = scalar_lea.sflag [#allocation5], %s244
        %s246 = sand.u32 %s48, 1
        %s247 = smul.addr %s246, 8
        %s248 = scalar_lea.vmem [#allocation4], %s247
        %p249 = pneg %p61
        %p250 = pneg %p58
        %s251 = sand.u32 %s76, 1
        %s252 = scalar_lea.sflag [#allocation9], %s251
        %s253 = sand.u32 %s76, 1
        %s254 = smul.addr %s253, 2
        %s255 = scalar_lea.vmem [#allocation8], %s254
        %p256 = pneg %p89
        %p257 = pneg %p86
        %p258 = pneg %p117
        %p259 = pneg %p114
        %s260 = sand.u32 %s104, 1
        %s261 = scalar_lea.sflag [#allocation6], %s260
        %s262 = sand.u32 %s104, 1
        %s263 = smul.addr %s262, 8
        %s264 = scalar_lea.vmem [#allocation10], %s263
        %p265 = pneg %p138
        %p266 = pneg %p135
        %p267 = pneg %p159
        %p268 = pneg %p156
        %s269 = smul.u32 2, %s31
        %s270 = sadd.s32 %s30, %s31
        %s271 = smul.u32 2, %s270
        %s272 = sadd.s32 %s30, %s31
        %s273 = smul.u32 2, %s272
        %p274 = scmp.eq.s32.totalorder %s30, 0
        %p275 = scmp.eq.s32.totalorder %s31, 0
        %p276 = pnand %p274, %p275
        %p277 = pneg %p276
        // Predicated region
        $region37: #{tpu_custom_call.1} parent=27 // pred_check
          _
        $region38: #{tpu_custom_call.1} parent=27 // pred_check_branch
          %279 = sbr.rel (%p276) target = $region40
        $region39: #{tpu_custom_call.1} parent=27 // pred_region
          %vm280 = vcmask 3072
          %281 = vst.msk [vmem:[#allocation2] sm:$0xf] %vm280, 0.0
          %v282 = vlaneseq
          %vm283 = vcmp.ge.s32.totalorder %v282, 0
          %vm284 = vcmp.lt.s32.totalorder %v282, 256
          %vm285 = vmand %vm283, %vm284
          %286 = vst.msk [vmem:[#allocation3] sm:$0x3] %vm285, 0.0
        $region40: #{tpu_custom_call.1} parent=27 // pred_fallthru
          _
        %v287 = vld [vmem:[%s230] sm:$0xff]
        %v288 = vld [vmem:[%s239] sm:$0x3]
        %v290 = vcombine.high %v287, %v287
        %vm292 = vcmask 1043456
        %v293 = vsel %vm292, %v287, -inf
        %v294 = vrot.slane %v293, 4
        %v295 = vmax.f32 %v293, %v294
        %v296 = vrot.slane %v295, 2
        %v297 = vmax.f32 %v295, %v296
        %v298 = vrot.slane %v297, 1
        %v299 = vmax.f32 %v297, %v298
        %v300 = vsel %vm292, %v290, -inf
        %v301 = vrot.slane %v300, 4
        %v302 = vmax.f32 %v300, %v301
        %v303 = vrot.slane %v302, 2
        %v304 = vmax.f32 %v302, %v303
        %v305 = vrot.slane %v304, 1
        %v306 = vmax.f32 %v304, %v305
        %v309 = vcombine.low %v299, %v306
        %v311 = vsub.f32 %v287, %v309
        %v312 = vmul.f32 %v311, 1.442695
        %v313 = vpow.pop %v312
        %v315 = vcombine.high %v313, %v313
        %v317 = vsel %vm292, %v313, 0.0
        %v318 = vrot.slane %v317, 4
        %v319 = vadd.f32 %v317, %v318
        %v320 = vrot.slane %v319, 2
        %v321 = vadd.f32 %v319, %v320
        %v322 = vrot.slane %v321, 1
        %v323 = vadd.f32 %v321, %v322
        %v324 = vsel %vm292, %v315, 0.0
        %v325 = vrot.slane %v324, 4
        %v326 = vadd.f32 %v324, %v325
        %v327 = vrot.slane %v326, 2
        %v328 = vadd.f32 %v326, %v327
        %v329 = vrot.slane %v328, 1
        %v330 = vadd.f32 %v328, %v329
        %v333 = vcombine.low %v323, %v330
        %v335 = vrcp.pop %v333
        %v336 = vmul.f32 %v313, %v335
        %v337 = vlog2.pop %v323
        %v338 = vmul.f32 %v337, 0.6931472
        %v339 = vlog2.pop %v330
        %v340 = vmul.f32 %v339, 0.6931472
        %v343 = vcombine.low %v338, %v340
        %v345 = vsub.f32 %v311, %v343
        %v346 = vmul.f32 %v336, %v345
        %v348 = vcombine.high %v346, %v346
        %v350 = vsel %vm292, %v346, 0.0
        %v351 = vrot.slane %v350, 4
        %v352 = vadd.f32 %v350, %v351
        %v353 = vrot.slane %v352, 2
        %v354 = vadd.f32 %v352, %v353
        %v355 = vrot.slane %v354, 1
        %v356 = vadd.f32 %v354, %v355
        %v357 = vsel %vm292, %v348, 0.0
        %v358 = vrot.slane %v357, 4
        %v359 = vadd.f32 %v357, %v358
        %v360 = vrot.slane %v359, 2
        %v361 = vadd.f32 %v359, %v360
        %v362 = vrot.slane %v361, 1
        %v363 = vadd.f32 %v361, %v362
        %v364 = vsub.f32 0.0, %v356
        %v365 = vsub.f32 0.0, %v363
        %v366 = vmul.f32 %v364, 0.33962777
        %v367 = vmul.f32 %v365, 0.33962777
        %v368 = vmul.f32 %v366, %v366
        %v369 = vmul.f32 %v367, %v367
        %v370 = vadd.f32 %v368, 1e-08
        %v371 = vadd.f32 %v369, 1e-08
        %v372 = vmul.f32 %v370, %v370
        %v373 = vmul.f32 %v371, %v371
        %v374 = vlaneseq
        %v375 = vand.u32 %v374, 127
        %v376 = vadd.s32 %v375, 128
        %s377 = smul.u32 %s31, 256
        %v378 = vstv %s377
        %v379 = vadd.s32 %v378, %v375
        %v380 = vadd.s32 %v378, %v376
        %vm381 = vcmp.lt.s32.totalorder %v379, 256
        %vm382 = vcmp.lt.s32.totalorder %v380, 256
        %v383 = vld [vmem:[#allocation3] sm:$0x3]
        %v384 = vsel %vm381, %v372, 0.0
        %v385 = vsel %vm382, %v373, 0.0
        %v388 = vcombine.low %v384, %v385
        %v390 = vunpack.c.l.s4 1966171168
        %v391 = vunpack.c.0.s8 %v390
        %v392 = vlaneseq
        %v393 = vshrl.u32 %v392, 7
        %v394 = vsub.s32 %v391, %v393
        %v395 = vrot.slane %v388, %v394
        %v397 = vunpack.c.l.s4 1966171168
        %v398 = vunpack.c.0.s8 %v397
        %v399 = vlaneseq
        %v400 = vshrl.u32 %v399, 7
        %v401 = vsub.s32 %v398, %v400
        %v402 = vrot.slane %v395, %v401
        %v404 = vadd.f32 %v383, %v402
        %v405 = vlaneseq
        %vm406 = vcmp.ge.s32.totalorder %v405, 0
        %vm407 = vcmp.lt.s32.totalorder %v405, 256
        %vm408 = vmand %vm406, %vm407
        %409 = vst.msk [vmem:[#allocation3] sm:$0x3] %vm408, %v404
        %v410 = vlaneseq
        %v411 = vshrl.u32 %v410, 7
        %vm412 = vcmp.ne.s32.totalorder %v288, 255
        %v413 = vlaneseq
        %v414 = vshrl.u32 %v413, 7
        %v415 = vsub.s32 0, %v414
        %v416 = vrot.slane %v288, %v415
        %v417 = vlaneseq
        %v418 = vshrl.u32 %v417, 7
        %v419 = vsub.s32 1, %v418
        %v420 = vrot.slane %v288, %v419
        %vm421 = vcmp.eq.s32.totalorder %v416, %v411
        %vm422 = vcmp.eq.s32.totalorder %v420, %v411
        %v423 = vsel %vm412, 1, 0
        %v424 = vlaneseq
        %v425 = vshrl.u32 %v424, 7
        %v426 = vsub.s32 0, %v425
        %v427 = vrot.slane %v423, %v426
        %v428 = vlaneseq
        %v429 = vshrl.u32 %v428, 7
        %v430 = vsub.s32 1, %v429
        %v431 = vrot.slane %v423, %v430
        %vm432 = vcmp.eq.s32.totalorder %v427, 1
        %vm433 = vcmp.eq.s32.totalorder %v431, 1
        %vm434 = vmand %vm421, %vm432
        %vm435 = vmand %vm422, %vm433
        %v436 = vsel %vm434, 1, 0
        %v437 = vsel %vm435, 1, 0
        %v438 = vcvt.s32.f32 %v436
        %v439 = vcvt.s32.f32 %v437
        %v441 = vcombine.high %v336, %v336
        %v443 = vsub.f32 %v438, %v336
        %v444 = vsub.f32 %v439, %v441
        %v445 = vand.u32 2147483647, %v443
        %v446 = vand.u32 2147483647, %v444
        %v447 = vcvt.s32.f32 %v423
        %v449 = vlaneseq
        %v450 = vshrl.u32 %v449, 7
        %v451 = vsub.s32 0, %v450
        %v452 = vrot.slane %v447, %v451
        %v453 = vlaneseq
        %v454 = vshrl.u32 %v453, 7
        %v455 = vsub.s32 1, %v454
        %v456 = vrot.slane %v447, %v455
        %v459 = vmul.f32 %v445, %v452
        %v460 = vmul.f32 %v446, %v456
        %v463 = vand.u32 %v459, 4294967294
        %v464 = vand.u32 %v460, 4294967294
        %v465 = vor.u32 %v463, %v436
        %v466 = vor.u32 %v464, %v437
        %v467 = vxor.u32 %v465, 4294967295
        %v468 = vxor.u32 %v466, 4294967295
        %v469 = vcombine.low %v467, %v468
        %470 = vst [vmem:[%s264] sm:$0xff] %v469
        %v471 = vld [vmem:[#allocation2] sm:$0xf]
        %v472 = vsel %vm292, %v438, 0.0
        %v473 = vsel %vm292, %v439, 0.0
        %v474 = vadd.f32 %v472, %v473
        %475 = vadd.xlane.f32.xlu0 %v474
        %v476 = vpop.xlane.xlu0 %475
        %v477 = vadd.f32 %v471, %v476
        %vm478 = vcmask 3072
        %479 = vst.msk [vmem:[#allocation2] sm:$0xf] %vm478, %v477
        %p480 = scmp.eq.s32.totalorder %s30, 1
        %p481 = pnand %p480, %p275
        %p482 = pneg %p481
        // Predicated region
        $region41: #{tpu_custom_call.1} parent=27 // pred_check
          _
        $region42: #{tpu_custom_call.1} parent=27 // pred_check_branch
          %484 = sbr.rel (%p481) target = $region44
        $region43: #{tpu_custom_call.1} parent=27 // pred_region
          %v485 = vld [vmem:[#allocation2] sm:$0xf]
          %486 = vst.msk [vmem:[%s3] sm:$0xf] %vm478, %v485
          %v487 = vld [vmem:[#allocation3] sm:$0x3]
          %v489 = vlaneseq
          %v490 = vshrl.u32 %v489, 7
          %v491 = vsub.s32 0, %v490
          %v492 = vrot.slane %v487, %v491
          %v493 = vlaneseq
          %v494 = vshrl.u32 %v493, 7
          %v495 = vsub.s32 1, %v494
          %v496 = vrot.slane %v487, %v495
          %vm499 = vcmask 1040384
          %v500 = vsel %vm499, %v492, 0.0
          %v501 = vsel %vm499, %v496, 0.0
          %v502 = vadd.f32 %v500, %v501
          %503 = vadd.xlane.f32.xlu0 %v502
          %v504 = vpop.xlane.xlu0 %503
          %v505 = vrot.slane %v504, 4
          %v506 = vadd.f32 %v504, %v505
          %v507 = vrot.slane %v506, 2
          %v508 = vadd.f32 %v506, %v507
          %v509 = vrot.slane %v508, 1
          %v510 = vadd.f32 %v508, %v509
          %s511 = vtos %v510
          %s512 = scalar_lea.smem [#allocation11], 0
          %513 = sst [smem:[%s512]] %s511
        $region44: #{tpu_custom_call.1} parent=27 // pred_fallthru
          _
        %s514 = sand.u32 %s104, 1
        %s515 = scalar_lea.sflag [#allocation6], %s514
        %s516 = sand.u32 %s104, 1
        %s517 = smul.addr %s516, 8
        %s518 = scalar_lea.vmem [#allocation10], %s517
        // Predicated region
        $region45: #{tpu_custom_call.1} parent=27 // pred_check
          %p519 = pneg %p114
        $region46: #{tpu_custom_call.1} parent=27 // pred_check_branch
          %521 = sbr.rel (%p519) target = $region48
        $region47: #{tpu_custom_call.1} parent=27 // pred_region
          %s522 = sadd.s32 %s30, %s31
          %s523 = smul.u32 2, %s522
          %s525 = ssub.s32 128, 128
          %526 = vsyncadd %s515, %s525
          %s527 = smul.addr %s523, 64
          %s528 = scalar_lea.hbm %s2, %s527
          %s530 = sshll.u32 %s518, 4
          %s531 = int_to_ptr.vmem [resolvable:$true] %s530
          %533 = dma.vmem_to_hbm [thread:$0]  %s531, 128, %s528, %s515
        $region48: #{tpu_custom_call.1} parent=27 // pred_fallthru
          _
        // Predicated region
        $region49: #{tpu_custom_call.1} parent=27 // pred_check
          %p534 = pneg %p135
        $region50: #{tpu_custom_call.1} parent=27 // pred_check_branch
          %536 = sbr.rel (%p534) target = $region52
        $region51: #{tpu_custom_call.1} parent=27 // pred_region
          _
        $region52: #{tpu_custom_call.1} parent=27 // pred_fallthru
          _
        // Predicated region
        $region53: #{tpu_custom_call.1} parent=27 // pred_check
          %p537 = pneg %p156
        $region54: #{tpu_custom_call.1} parent=27 // pred_check_branch
          %539 = sbr.rel (%p537) target = $region56
        $region55: #{tpu_custom_call.1} parent=27 // pred_region
          %s541 = ssub.s32 16, 16
          %542 = vsyncadd [#allocation7], %s541
          %545 = dma.smem_to_hbm [#allocation11], 16, %s4, [#allocation7]
        $region56: #{tpu_custom_call.1} parent=27 // pred_fallthru
          _
        // Predicated region
        $region57: #{tpu_custom_call.1} parent=27 // pred_check
          %p546 = pneg %p135
        $region58: #{tpu_custom_call.1} parent=27 // pred_check_branch
          %548 = sbr.rel (%p546) target = $region60
        $region59: #{tpu_custom_call.1} parent=27 // pred_region
          _
        $region60: #{tpu_custom_call.1} parent=27 // pred_fallthru
          _
        // Predicated region
        $region61: #{tpu_custom_call.1} parent=27 // pred_check
          %p549 = pneg %p156
        $region62: #{tpu_custom_call.1} parent=27 // pred_check_branch
          %551 = sbr.rel (%p549) target = $region64
        $region63: #{tpu_custom_call.1} parent=27 // pred_region
          %552 = dma.done [#allocation7], 16
        $region64: #{tpu_custom_call.1} parent=27 // pred_fallthru
          _
        %553 = sfence
      $region28: #{tpu_custom_call.1} parent=5 // pred_fallthru
        _
      %p554 = scmp.le.s32.totalorder 2, %s21
      // Predicated region
      $region65: #{tpu_custom_call.1} parent=5 // pred_check
        %p555 = pneg %p554
      $region66: #{tpu_custom_call.1} parent=5 // pred_check_branch
        %557 = sbr.rel (%p555) target = $region68
      $region67: #{tpu_custom_call.1} parent=5 // pred_region
        %s558 = ssub.s32 %s21, 2
        // Predicated region
        $region69: #{tpu_custom_call.1} parent=67 // pred_check
          %p559 = pneg %p120
        $region70: #{tpu_custom_call.1} parent=67 // pred_check_branch
          %561 = sbr.rel (%p559) target = $region72
        $region71: #{tpu_custom_call.1} parent=67 // pred_region
          %s562 = sand.u32 %s105, 1
          %s563 = scalar_lea.sflag [#allocation6], %s562
          %s564 = sand.u32 %s105, 1
          %s565 = smul.addr %s564, 8
          %s566 = scalar_lea.vmem [#allocation10], %s565
          %567 = dma.done %s563, 128
        $region72: #{tpu_custom_call.1} parent=67 // pred_fallthru
          _
      $region68: #{tpu_custom_call.1} parent=5 // pred_fallthru
        _
    $region6: #{tpu_custom_call.1} parent=1 // loop_footer
      %s25 = sadd.s32 1, %s21
    $region7: #{tpu_custom_call.1} parent=1 // loop_footer_branch
      %20 = sbr.rel target = $region3
    $region8: #{tpu_custom_call.1} parent=1 // loop_exit
      _
    %568 = vsyncpa [#allocation5], 1
    %s569 = scalar_lea.sflag [#allocation5], 1
    %570 = vsyncpa %s569, 1
    %571 = vsyncpa [#allocation9], 1
    %s572 = scalar_lea.sflag [#allocation9], 1
    %573 = vsyncpa %s572, 1
    %574 = vsyncpa [#allocation6], 1
    %s575 = scalar_lea.sflag [#allocation6], 1
    %576 = vsyncpa %s575, 1
    %577 = vsyncpa [#allocation7], 1
    %s578 = scalar_lea.sflag [#allocation7], 1
    %579 = vsyncpa %s578, 1

</llo_original>
